<compile_context>
chip_gen: v6e
topology: v6e:2x2x1
jax: 0.10.0
libtpu: 0.0.40
codegen_flags: <defaults>
</compile_context>

<pallas_src>
import functools

import jax
import jax.numpy as jnp
from jax.experimental import pallas as pl
from jax.experimental.pallas import tpu as pltpu

BN_EPS = 1e-5
IN_FEATURES = 36
HIDDEN = 32
OUT_FEATURES = 18

# Conservative stash budget: the (B_pad, 32) bf16 stash lane-pads to 128 lanes in
# VMEM (~256 B/row).  16 MiB stash + ~10 MiB of double-buffered tiles stays well
# under v7x's 64 MiB physical VMEM; v5e/v6e (128 MiB) have extra slack.
_STASH_BUDGET_BYTES = 16 * 1024 * 1024
_VMEM_LIMIT_BYTES = 40 * 1024 * 1024


def _round_up(n, m):
    return ((n + m - 1) // m) * m


def _fold_bn(sum_vec, sumsq_vec, gamma, beta, inv_n):
    """Fold batch stats + affine into one per-feature (scale, shift)."""
    mean = sum_vec * inv_n
    var = sumsq_vec * inv_n - mean * mean          # biased variance (torch training mode)
    var = jnp.maximum(var, 0.0)                    # guard E[h^2]-mean^2 cancellation
    scale = gamma * jax.lax.rsqrt(var + BN_EPS)
    shift = beta - mean * scale
    return scale, shift


# ----------------------------------------------------------------------------
# Single-pass kernel: whole (padded) batch in one block (num_tiles == 1).
# ----------------------------------------------------------------------------
def fusion_kernel_1pass(x_ref, w1_ref, w2_ref, pp_ref, o_ref, *, batch_size):
    # x_ref: (TM, 36)  w1_ref: (36, 32)  w2_ref: (32, 18)
    # pp_ref: (3, 32)  rows = [gamma, beta, b2 (lane-padded 18->32)]
    h = jnp.dot(x_ref[...], w1_ref[...], preferred_element_type=jnp.float32)
    s = jnp.sum(h, axis=0, keepdims=True)
    sq = jnp.sum(h * h, axis=0, keepdims=True)
    scale, shift = _fold_bn(s, sq, pp_ref[0:1, :], pp_ref[1:2, :], 1.0 / batch_size)
    a = jnp.maximum(h * scale + shift, 0.0)
    out = jnp.dot(a, w2_ref[...], preferred_element_type=jnp.float32)
    o_ref[...] = (out + pp_ref[2:3, :OUT_FEATURES]).astype(o_ref.dtype)


# ----------------------------------------------------------------------------
# 2-pass kernel with a persistent VMEM h-stash (preferred large-batch path).
# ----------------------------------------------------------------------------
def fusion_kernel_2pass_stash(x_ref, w1_ref, w2_ref, pp_ref, o_ref,
                              sum_ref, sumsq_ref, ss_ref, h_ref, *,
                              batch_size, tm):
    p = pl.program_id(0)                       # 0 = stats pass, 1 = apply pass
    t = pl.program_id(1)                       # batch tile
    row0 = pl.multiple_of(t * tm, 16)          # TM is always a multiple of 16

    @pl.when(jnp.logical_and(p == 0, t == 0))
    def _init():
        sum_ref[...] = jnp.zeros_like(sum_ref)
        sumsq_ref[...] = jnp.zeros_like(sumsq_ref)

    @pl.when(p == 0)
    def _stats():
        # Linear-1 bias intentionally omitted: cancelled exactly by the BN mean
        # subtraction (also keeps zero-padded batch rows out of the statistics).
        h = jnp.dot(x_ref[...], w1_ref[...], preferred_element_type=jnp.float32)
        sum_ref[...] += jnp.sum(h, axis=0, keepdims=True)
        sumsq_ref[...] += jnp.sum(h * h, axis=0, keepdims=True)
        h_ref[pl.ds(row0, tm), :] = h.astype(h_ref.dtype)

    @pl.when(jnp.logical_and(p == 1, t == 0))
    def _fold():
        scale, shift = _fold_bn(sum_ref[...], sumsq_ref[...],
                                pp_ref[0:1, :], pp_ref[1:2, :], 1.0 / batch_size)
        ss_ref[0:1, :] = scale
        ss_ref[1:2, :] = shift

    @pl.when(p == 1)
    def _apply():
        h = h_ref[pl.ds(row0, tm), :].astype(jnp.float32)
        a = jnp.maximum(h * ss_ref[0:1, :] + ss_ref[1:2, :], 0.0)
        out = jnp.dot(a, w2_ref[...], preferred_element_type=jnp.float32)
        o_ref[...] = (out + pp_ref[2:3, :OUT_FEATURES]).astype(o_ref.dtype)


# ----------------------------------------------------------------------------
# 2-pass recompute fallback (stash does not fit VMEM at this batch size).
# ----------------------------------------------------------------------------
def fusion_kernel_2pass_recompute(x_ref, w1_ref, w2_ref, pp_ref, o_ref,
                                  sum_ref, sumsq_ref, ss_ref, *, batch_size):
    p = pl.program_id(0)
    t = pl.program_id(1)

    # Needed by both passes.
    h = jnp.dot(x_ref[...], w1_ref[...], preferred_element_type=jnp.float32)

    @pl.when(jnp.logical_and(p == 0, t == 0))
    def _init():
        sum_ref[...] = jnp.zeros_like(sum_ref)
        sumsq_ref[...] = jnp.zeros_like(sumsq_ref)

    @pl.when(p == 0)
    def _stats():
        sum_ref[...] += jnp.sum(h, axis=0, keepdims=True)
        sumsq_ref[...] += jnp.sum(h * h, axis=0, keepdims=True)

    @pl.when(jnp.logical_and(p == 1, t == 0))
    def _fold():
        scale, shift = _fold_bn(sum_ref[...], sumsq_ref[...],
                                pp_ref[0:1, :], pp_ref[1:2, :], 1.0 / batch_size)
        ss_ref[0:1, :] = scale
        ss_ref[1:2, :] = shift

    @pl.when(p == 1)
    def _apply():
        a = jnp.maximum(h * ss_ref[0:1, :] + ss_ref[1:2, :], 0.0)
        out = jnp.dot(a, w2_ref[...], preferred_element_type=jnp.float32)
        o_ref[...] = (out + pp_ref[2:3, :OUT_FEATURES]).astype(o_ref.dtype)


# ----------------------------------------------------------------------------
# Wrapper
# ----------------------------------------------------------------------------
def fusion_forward(x, params, *, tm_max=4096, out_dtype=jnp.float32,
                   stash_budget_bytes=_STASH_BUDGET_BYTES):
    """Forward pass; x: (B, ...) flattened from dim 1 (like torch flatten(start_dim=1))."""
    w1, b1, gamma, beta, w2, b2 = params
    del b1  # mathematically a no-op under training-mode BatchNorm (mean-subtracted)

    B = x.shape[0]
    x2d = x.reshape(B, -1)  # keep source dtype; no wrapper upcast
    assert x2d.shape[1] == IN_FEATURES, f"expected {IN_FEATURES} features, got {x2d.shape[1]}"

    # Reduced-precision MXU path: bf16 x keeps bf16 weights; accumulation stays f32.
    if x2d.dtype == jnp.bfloat16:
        w1 = w1.astype(jnp.bfloat16)
        w2 = w2.astype(jnp.bfloat16)

    # Batch tile: multiple of 16 rows (bf16 sublane packing; also covers f32's 8).
    TM = _round_up(min(tm_max, _round_up(B, 16)), 16)
    B_pad = _round_up(B, TM)
    if B_pad != B:
        x2d = jnp.pad(x2d, ((0, B_pad - B), (0, 0)))  # zero rows contribute 0 to stats
    num_tiles = B_pad // TM

    # Pack small per-feature params into one resident (3, 32) block:
    # row 0 = gamma, row 1 = beta, row 2 = b2 zero-padded from 18 to 32 lanes.
    pp = jnp.concatenate(
        [
            gamma.reshape(1, HIDDEN).astype(jnp.float32),
            beta.reshape(1, HIDDEN).astype(jnp.float32),
            jnp.pad(b2.reshape(1, OUT_FEATURES).astype(jnp.float32),
                    ((0, 0), (0, HIDDEN - OUT_FEATURES))),
        ],
        axis=0,
    )

    # ---------------- small batch: single-pass kernel ----------------
    if num_tiles == 1:
        out = pl.pallas_call(
            functools.partial(fusion_kernel_1pass, batch_size=float(B)),
            out_shape=jax.ShapeDtypeStruct((B_pad, OUT_FEATURES), out_dtype),
            grid_spec=pltpu.PrefetchScalarGridSpec(
                num_scalar_prefetch=0,
                grid=(1,),
                in_specs=[
                    pl.BlockSpec((TM, IN_FEATURES), lambda i: (0, 0)),
                    pl.BlockSpec((IN_FEATURES, HIDDEN), lambda i: (0, 0)),
                    pl.BlockSpec((HIDDEN, OUT_FEATURES), lambda i: (0, 0)),
                    pl.BlockSpec((3, HIDDEN), lambda i: (0, 0)),
                ],
                out_specs=pl.BlockSpec((TM, OUT_FEATURES), lambda i: (0, 0)),
            ),
            compiler_params=pltpu.CompilerParams(
                dimension_semantics=("arbitrary",),
                vmem_limit_bytes=32 * 1024 * 1024,
            ),
        )(x2d, w1, w2, pp)
        return out[:B]

    # ---------------- large batch: 2-pass kernel ----------------
    # h stash is (B_pad, 32) bf16, but VMEM lane-pads the minor dim to 128 lanes.
    stash_vmem_bytes = B_pad * 128 * 2
    use_stash = stash_vmem_bytes <= stash_budget_bytes

    weight_specs = [
        pl.BlockSpec((IN_FEATURES, HIDDEN), lambda p, t: (0, 0)),   # W1, resident
        pl.BlockSpec((HIDDEN, OUT_FEATURES), lambda p, t: (0, 0)),  # W2, resident
        pl.BlockSpec((3, HIDDEN), lambda p, t: (0, 0)),             # packed gamma/beta/b2
    ]
    # Output block index frozen during pass 0 -> no wasted pass-0 HBM writeback.
    out_spec = pl.BlockSpec((TM, OUT_FEATURES), lambda p, t: (p * t, 0))
    scratch = [
        pltpu.VMEM((1, HIDDEN), jnp.float32),   # sum(h)
        pltpu.VMEM((1, HIDDEN), jnp.float32),   # sum(h*h)
        pltpu.VMEM((2, HIDDEN), jnp.float32),   # folded [scale; shift], computed once
    ]

    if use_stash:
        kernel = functools.partial(fusion_kernel_2pass_stash,
                                   batch_size=float(B), tm=TM)
        # x block index frozen during pass 1: pass 1 reads h from the VMEM stash,
        # so only one redundant x-tile DMA at the pass boundary.
        x_spec = pl.BlockSpec((TM, IN_FEATURES), lambda p, t: ((1 - p) * t, 0))
        scratch = scratch + [pltpu.VMEM((B_pad, HIDDEN), jnp.bfloat16)]
    else:
        kernel = functools.partial(fusion_kernel_2pass_recompute,
                                   batch_size=float(B))
        x_spec = pl.BlockSpec((TM, IN_FEATURES), lambda p, t: (t, 0))

    out = pl.pallas_call(
        kernel,
        out_shape=jax.ShapeDtypeStruct((B_pad, OUT_FEATURES), out_dtype),
        grid_spec=pltpu.PrefetchScalarGridSpec(
            num_scalar_prefetch=0,
            grid=(2, num_tiles),  # (pass, batch tile); pass is the outer axis
            in_specs=[x_spec] + weight_specs,
            out_specs=out_spec,
            scratch_shapes=scratch,
        ),
        compiler_params=pltpu.CompilerParams(
            # Stats accumulation couples all batch tiles -> both axes "arbitrary".
            # TODO(synk): v7x megacore would want a two-call split (parallel stats
            # kernel + tiny wrapper reduce + parallel apply kernel).
            dimension_semantics=("arbitrary", "arbitrary"),
            vmem_limit_bytes=_VMEM_LIMIT_BYTES,
        ),
    )(x2d, w1, w2, pp)

    return out[:B]
    # TODO(synk): torch BatchNorm1d in training mode also mutates running_mean /
    # running_var and raises for B == 1; that stateful side effect is not modeled here.


def fusion_reference(x, params):
    """Pure-JAX reference matching the torch forward (training-mode BN)."""
    w1, b1, gamma, beta, w2, b2 = params
    x2d = x.reshape(x.shape[0], -1).astype(jnp.float32)
    h = jnp.dot(x2d, w1, preferred_element_type=jnp.float32) + b1
    mean = jnp.mean(h, axis=0, keepdims=True)
    var = jnp.mean((h - mean) ** 2, axis=0, keepdims=True)
    h = (h - mean) * jax.lax.rsqrt(var + BN_EPS) * gamma + beta
    h = jnp.maximum(h, 0.0)
    return jnp.dot(h, w2, preferred_element_type=jnp.float32) + b2


def init_params(key):
    """Deterministic synthetic parameters matching the torch module's shapes."""
    k1, k2, k3, k4 = jax.random.split(key, 4)
    bound1 = 1.0 / jnp.sqrt(float(IN_FEATURES))
    w1 = jax.random.uniform(k1, (IN_FEATURES, HIDDEN), jnp.float32, -bound1, bound1)
    b1 = jax.random.uniform(k2, (1, HIDDEN), jnp.float32, -bound1, bound1)
    gamma = jnp.ones((1, HIDDEN), jnp.float32)
    beta = jnp.zeros((1, HIDDEN), jnp.float32)
    bound2 = 1.0 / jnp.sqrt(float(HIDDEN))
    w2 = jax.random.uniform(k3, (HIDDEN, OUT_FEATURES), jnp.float32, -bound2, bound2)
    b2 = jax.random.uniform(k4, (1, OUT_FEATURES), jnp.float32, -bound2, bound2)
    return (w1, b1, gamma, beta, w2, b2)


if __name__ == "__main__":
    key = jax.random.PRNGKey(0)
    kx, kp, kx2 = jax.random.split(key, 3)
    params = init_params(kp)

    # Small-batch path (single-pass kernel): flatten(start_dim=1) -> 36 features.
    B = 8
    x = jax.random.normal(kx, (B, 6, 6), jnp.float32)
    out = jax.block_until_ready(fusion_forward(x, params))
    ref = jax.block_until_ready(fusion_reference(x, params))
    assert out.shape == (B, OUT_FEATURES), out.shape
    assert jnp.all(jnp.isfinite(out))
    assert jnp.allclose(out, ref, atol=5e-2, rtol=5e-2)

    # Multi-tile path with the VMEM h-stash (tiny tiles just to exercise it).
    B2 = 40
    x2 = jax.random.normal(kx2, (B2, IN_FEATURES), jnp.float32)
    ref2 = jax.block_until_ready(fusion_reference(x2, params))
    out2 = jax.block_until_ready(fusion_forward(x2, params, tm_max=16))
    assert out2.shape == (B2, OUT_FEATURES)
    assert jnp.allclose(out2, ref2, atol=5e-2, rtol=5e-2)

    # Multi-tile recompute fallback (force by disabling the stash budget).
    out3 = jax.block_until_ready(
        fusion_forward(x2, params, tm_max=16, stash_budget_bytes=0))
    assert jnp.allclose(out3, ref2, atol=5e-2, rtol=5e-2)

    print("KERNEL_OK")
</pallas_src>

<mosaic_0001>
module attributes {stable_mosaic.version = 11 : i64} {
  func.func @fusion_kernel_1pass(%arg0: i32, %arg1: memref<16x36xf32, #tpu.memory_space<vmem>>, %arg2: memref<36x32xf32, #tpu.memory_space<vmem>>, %arg3: memref<32x18xf32, #tpu.memory_space<vmem>>, %arg4: memref<3x32xf32, #tpu.memory_space<vmem>>, %arg5: memref<16x18xf32, #tpu.memory_space<vmem>>) attributes {dimension_semantics = [#tpu.dimension_semantics<arbitrary>], iteration_bounds = array<i64: 1>, scalar_prefetch = 0 : i64, scratch_operands = 0 : i64, tpu.core_type = #tpu.core_type<tc>, window_params = [{pipeline_mode = #tpu.pipeline_mode<synchronous>, transform_indices = @transform_0, window_bounds = array<i64: 16, 36>}, {pipeline_mode = #tpu.pipeline_mode<synchronous>, transform_indices = @transform_1, window_bounds = array<i64: 36, 32>}, {pipeline_mode = #tpu.pipeline_mode<synchronous>, transform_indices = @transform_2, window_bounds = array<i64: 32, 18>}, {pipeline_mode = #tpu.pipeline_mode<synchronous>, transform_indices = @transform_3, window_bounds = array<i64: 3, 32>}, {pipeline_mode = #tpu.pipeline_mode<synchronous>, transform_indices = @transform_4, window_bounds = array<i64: 16, 18>}]} {
    %c0 = arith.constant 0 : index
    %c0_0 = arith.constant 0 : index
    %0 = vector.load %arg1[%c0, %c0_0] : memref<16x36xf32, #tpu.memory_space<vmem>>, vector<16x36xf32>
    %c0_1 = arith.constant 0 : index
    %c0_2 = arith.constant 0 : index
    %1 = vector.load %arg2[%c0_1, %c0_2] : memref<36x32xf32, #tpu.memory_space<vmem>>, vector<36x32xf32>
    %cst = arith.constant dense<0.000000e+00> : vector<16x32xf32>
    %2 = tpu.matmul %0, %1, %cst {dimension_numbers = #tpu.dot_dimension_numbers<[1], [0], [0], [1], [0, 0, 1, 1], [], []>} : vector<16x36xf32>, vector<36x32xf32>, vector<16x32xf32> -> vector<16x32xf32>
    %cst_3 = arith.constant dense<0.000000e+00> : vector<32xf32>
    %3 = vector.multi_reduction <add>, %2, %cst_3 [0] : vector<16x32xf32> to vector<32xf32>
    %4 = vector.shape_cast %3 : vector<32xf32> to vector<1x32xf32>
    %5 = arith.mulf %2, %2 : vector<16x32xf32>
    %cst_4 = arith.constant dense<0.000000e+00> : vector<32xf32>
    %6 = vector.multi_reduction <add>, %5, %cst_4 [0] : vector<16x32xf32> to vector<32xf32>
    %7 = vector.shape_cast %6 : vector<32xf32> to vector<1x32xf32>
    %c0_5 = arith.constant 0 : index
    %c0_6 = arith.constant 0 : index
    %8 = vector.load %arg4[%c0_5, %c0_6] : memref<3x32xf32, #tpu.memory_space<vmem>>, vector<1x32xf32>
    %c1 = arith.constant 1 : index
    %c0_7 = arith.constant 0 : index
    %9 = vector.load %arg4[%c1, %c0_7] : memref<3x32xf32, #tpu.memory_space<vmem>>, vector<1x32xf32>
    %cst_8 = arith.constant 1.250000e-01 : f32
    %10 = vector.broadcast %cst_8 : f32 to vector<1x32xf32>
    %11 = arith.mulf %4, %10 : vector<1x32xf32>
    %cst_9 = arith.constant 1.250000e-01 : f32
    %12 = vector.broadcast %cst_9 : f32 to vector<1x32xf32>
    %13 = arith.mulf %7, %12 : vector<1x32xf32>
    %14 = arith.mulf %11, %11 : vector<1x32xf32>
    %15 = arith.subf %13, %14 : vector<1x32xf32>
    %cst_10 = arith.constant 0.000000e+00 : f32
    %16 = vector.broadcast %cst_10 : f32 to vector<1x32xf32>
    %17 = arith.maximumf %15, %16 : vector<1x32xf32>
    %cst_11 = arith.constant 9.99999974E-6 : f32
    %18 = vector.broadcast %cst_11 : f32 to vector<1x32xf32>
    %19 = arith.addf %17, %18 : vector<1x32xf32>
    %20 = math.rsqrt %19 : vector<1x32xf32>
    %21 = arith.mulf %8, %20 : vector<1x32xf32>
    %22 = arith.mulf %11, %21 : vector<1x32xf32>
    %23 = arith.subf %9, %22 : vector<1x32xf32>
    %24 = vector.broadcast %21 : vector<1x32xf32> to vector<16x32xf32>
    %25 = arith.mulf %2, %24 : vector<16x32xf32>
    %26 = vector.broadcast %23 : vector<1x32xf32> to vector<16x32xf32>
    %27 = arith.addf %25, %26 : vector<16x32xf32>
    %cst_12 = arith.constant 0.000000e+00 : f32
    %28 = vector.broadcast %cst_12 : f32 to vector<16x32xf32>
    %29 = arith.maximumf %27, %28 : vector<16x32xf32>
    %c0_13 = arith.constant 0 : index
    %c0_14 = arith.constant 0 : index
    %30 = vector.load %arg3[%c0_13, %c0_14] : memref<32x18xf32, #tpu.memory_space<vmem>>, vector<32x18xf32>
    %cst_15 = arith.constant dense<0.000000e+00> : vector<16x18xf32>
    %31 = tpu.matmul %29, %30, %cst_15 {dimension_numbers = #tpu.dot_dimension_numbers<[1], [0], [0], [1], [0, 0, 1, 1], [], []>} : vector<16x32xf32>, vector<32x18xf32>, vector<16x18xf32> -> vector<16x18xf32>
    %c2 = arith.constant 2 : index
    %c0_16 = arith.constant 0 : index
    %32 = vector.load %arg4[%c2, %c0_16] : memref<3x32xf32, #tpu.memory_space<vmem>>, vector<1x18xf32>
    %33 = vector.broadcast %32 : vector<1x18xf32> to vector<16x18xf32>
    %34 = arith.addf %31, %33 : vector<16x18xf32>
    %c0_17 = arith.constant 0 : index
    %c0_18 = arith.constant 0 : index
    %35 = vector.load %arg5[%c0_17, %c0_18] : memref<16x18xf32, #tpu.memory_space<vmem>>, vector<16x18xf32>
    tpu.vector_store %arg5[%c0_17, %c0_18], %34 {strides = array<i32>} : memref<16x18xf32, #tpu.memory_space<vmem>>, vector<16x18xf32>,
    return
  }
  func.func @transform_0(%arg0: i32) -> (i32, i32) {
    %c0_i32 = arith.constant 0 : i32
    %c0_i32_0 = arith.constant 0 : i32
    %c0_i32_1 = arith.constant 0 : i32
    return %c0_i32, %c0_i32_0 : i32, i32
  }
  func.func @transform_1(%arg0: i32) -> (i32, i32) {
    %c0_i32 = arith.constant 0 : i32
    %c0_i32_0 = arith.constant 0 : i32
    %c0_i32_1 = arith.constant 0 : i32
    return %c0_i32, %c0_i32_0 : i32, i32
  }
  func.func @transform_2(%arg0: i32) -> (i32, i32) {
    %c0_i32 = arith.constant 0 : i32
    %c0_i32_0 = arith.constant 0 : i32
    %c0_i32_1 = arith.constant 0 : i32
    return %c0_i32, %c0_i32_0 : i32, i32
  }
  func.func @transform_3(%arg0: i32) -> (i32, i32) {
    %c0_i32 = arith.constant 0 : i32
    %c0_i32_0 = arith.constant 0 : i32
    %c0_i32_1 = arith.constant 0 : i32
    return %c0_i32, %c0_i32_0 : i32, i32
  }
  func.func @transform_4(%arg0: i32) -> (i32, i32) {
    %c0_i32 = arith.constant 0 : i32
    %c0_i32_0 = arith.constant 0 : i32
    %c0_i32_1 = arith.constant 0 : i32
    return %c0_i32, %c0_i32_0 : i32, i32
  }
}

</mosaic_0001>

<llo_original>
// kernel: tpu_custom_call.1
$region0: #{tpu_custom_call.1}
  #allocation0 [shape = 'u32[]', space=smem, size = 0x4, offset = 0x4, fixed_abs, tag = 'smem constant byte address 0x4 - core index']
  #allocation1 [shape = 'u32[144,128]{1,0:T(1,128)}', space=vmem, size = 0x12000, scoped, tag = 'internal scratch']
  %s0 = inlined_call_operand.vmem [shape: f32[16,36], index: 0, kind: input, shape index: {}]
  %s1 = inlined_call_operand.vmem [shape: f32[36,32], index: 1, kind: input, shape index: {}]
  %s2 = inlined_call_operand.vmem [shape: f32[32,18], index: 2, kind: input, shape index: {}]
  %s3 = inlined_call_operand.vmem [shape: f32[3,32], index: 3, kind: input, shape index: {}]
  %s4 = inlined_call_operand.hbm [shape: f32[16,18], index: 4, kind: output, shape index: {}]
  %s5 = sld [smem:[#allocation0]]
  $region26: #{tpu_custom_call.1} parent=0
    _
  %s7 = ssub.s32 1, %s5
  %s8 = scalar_select 0, %s7, %s5
  $region1: #{tpu_custom_call.1} parent=0
    #allocation2 [shape = 'u8[8192]{0}', space=vmem, size = 0x2000, scoped, tag = 'output window, operand 0, single buffered']
    #allocation3 [shape = 's32[1]{0}', space=sflag, size = 0x4, scoped, tag = 'scoped memory for tpu_custom_call.1']
    %9 = vsyncpa [#allocation3], 0
    // Predicated region
    $region2: #{tpu_custom_call.1} parent=1 // pred_check
      _
    $region3: #{tpu_custom_call.1} parent=1 // pred_check_branch
      %11 = sbr.rel (0) target = $region5
    $region4: #{tpu_custom_call.1} parent=1 // pred_region
      _
    $region5: #{tpu_custom_call.1} parent=1 // pred_fallthru
      _
    // Predicated region
    $region6: #{tpu_custom_call.1} parent=1 // pred_check
      _
    $region7: #{tpu_custom_call.1} parent=1 // pred_check_branch
      %13 = sbr.rel (0) target = $region9
    $region8: #{tpu_custom_call.1} parent=1 // pred_region
      _
    $region9: #{tpu_custom_call.1} parent=1 // pred_fallthru
      _
    // Predicated region
    $region10: #{tpu_custom_call.1} parent=1 // pred_check
      _
    $region11: #{tpu_custom_call.1} parent=1 // pred_check_branch
      %15 = sbr.rel (0) target = $region13
    $region12: #{tpu_custom_call.1} parent=1 // pred_region
      _
    $region13: #{tpu_custom_call.1} parent=1 // pred_fallthru
      _
    // Predicated region
    $region14: #{tpu_custom_call.1} parent=1 // pred_check
      _
    $region15: #{tpu_custom_call.1} parent=1 // pred_check_branch
      %17 = sbr.rel (0) target = $region17
    $region16: #{tpu_custom_call.1} parent=1 // pred_region
      _
    $region17: #{tpu_custom_call.1} parent=1 // pred_fallthru
      _
    %v18 = vld [vmem:[%s0] sm:$0xff]
    %v19 = vld [vmem:[%s0 + $0x8] sm:$0xff]
    %v20 = vld [vmem:[%s1] sm:$0xff]
    %v21 = vld [vmem:[%s1 + $0x8] sm:$0xff]
    %v22 = vld [vmem:[%s1 + $0x10] sm:$0xff]
    %v23 = vld [vmem:[%s1 + $0x18] sm:$0xff]
    %v24 = vld [vmem:[%s1 + $0x20] sm:$0xf]
    %vm25 = vcmask 293888
    %v27 = vsel %vm25, %v18, 0
    %v30 = vsel %vm25, %v19, 0
    %vm32 = vcmask 1043456
    %v34 = vsel %vm32, %v24, 0
    %36 = vmatprep.subr.mxu0 0.0
    %37 = vmatpush1.msra.mxu0 0.0
    %38 = vmatprep.subr.mxu0 0.0
    %39 = vmatpush1.msra.mxu0 0.0
    %40 = vmatprep.subr.mxu0 0.0
    %41 = vmatpush1.msra.mxu0 0.0
    %42 = vmatprep.subr.mxu0 0.0
    %43 = vmatpush1.msra.mxu0 0.0
    %44 = vmatprep.subr.mxu0 0.0
    %45 = vmatpush1.msra.mxu0 0.0
    %46 = vmatprep.subr.mxu0 0.0
    %47 = vmatpush1.msra.mxu0 0.0
    %48 = vmatprep.subr.mxu0 0.0
    %49 = vmatpush1.msra.mxu0 0.0
    %50 = vmatprep.subr.mxu0 0.0
    %51 = vmatpush1.msra.mxu0 0.0
    %52 = vmatprep.subr.mxu0 0.0
    %53 = vmatpush1.msra.mxu0 0.0
    %54 = vmatprep.subr.mxu0 0.0
    %55 = vmatpush1.msra.mxu0 0.0
    %56 = vmatprep.subr.mxu0 0.0
    %57 = vmatpush1.msra.mxu0 0.0
    %58 = vmatprep.subr.mxu0 0.0
    %59 = vmatpush1.msra.mxu0 %v34
    %60 = vmatprep.subr.mxu0 0.0
    %61 = vmatpush1.msra.mxu0 %v23
    %62 = vmatprep.subr.mxu0 0.0
    %63 = vmatpush1.msra.mxu0 %v22
    %64 = vmatprep.subr.mxu0 0.0
    %65 = vmatpush1.msra.mxu0 %v21
    %66 = vmatprep.subr.mxu0 0.0
    %67 = vmatpush1.msra.mxu0 %v20
    %68 = vmatprep.subr.mxu0 0.0
    %69 = vmatpush2.msra.mxu0 0.0
    %70 = vmatprep.subr.mxu0 0.0
    %71 = vmatpush2.msra.mxu0 0.0
    %72 = vmatprep.subr.mxu0 0.0
    %73 = vmatpush2.msra.mxu0 0.0
    %74 = vmatprep.subr.mxu0 0.0
    %75 = vmatpush2.msra.mxu0 0.0
    %76 = vmatprep.subr.mxu0 0.0
    %77 = vmatpush2.msra.mxu0 0.0
    %78 = vmatprep.subr.mxu0 0.0
    %79 = vmatpush2.msra.mxu0 0.0
    %80 = vmatprep.subr.mxu0 0.0
    %81 = vmatpush2.msra.mxu0 0.0
    %82 = vmatprep.subr.mxu0 0.0
    %83 = vmatpush2.msra.mxu0 0.0
    %84 = vmatprep.subr.mxu0 0.0
    %85 = vmatpush2.msra.mxu0 0.0
    %86 = vmatprep.subr.mxu0 0.0
    %87 = vmatpush2.msra.mxu0 0.0
    %88 = vmatprep.subr.mxu0 0.0
    %89 = vmatpush2.msra.mxu0 0.0
    %90 = vmatprep.subr.mxu0 0.0
    %91 = vmatpush2.msra.mxu0 0.0
    %92 = vmatprep.subr.mxu0 0.0
    %93 = vmatpush2.msra.mxu0 0.0
    %94 = vmatprep.subr.mxu0 0.0
    %95 = vmatpush2.msra.mxu0 0.0
    %96 = vmatprep.subr.mxu0 0.0
    %97 = vmatpush2.msra.mxu0 0.0
    %98 = vmatprep.subr.mxu0 0.0
    %99 = vmatpush2.msra.mxu0 0.0
    %100 = vmatprep.mubr.f32.mxu0 0.0
    %101 = vmatmul.mubr.f32.gmra.mxu0 %v27
    %v102 = vpop.f32.mrf.mxu0
    %v103 = vadd.f32 0.0, %v102
    %v104 = vpop.f32.mrf.mxu0
    %105 = vmatprep.mubr.f32.mxu0 0.0
    %106 = vmatmul.mubr.f32.gmra.mxu0 %v30
    %v107 = vpop.f32.mrf.mxu0
    %v108 = vadd.f32 0.0, %v107
    %v109 = vpop.f32.mrf.mxu0
    %110 = vdwg.mxu0
    %vm111 = vcmask 261120
    %v112 = vsel %vm111, %v103, 0.0
    %v113 = vsel %vm111, %v108, 0.0
    %v114 = vadd.f32 %v112, %v113
    %v115 = vrot.slane %v114, 4
    %v116 = vadd.f32 %v114, %v115
    %v117 = vrot.slane %v116, 2
    %v118 = vadd.f32 %v116, %v117
    %v119 = vrot.slane %v118, 1
    %v120 = vadd.f32 %v118, %v119
    %v121 = vmul.f32 %v103, %v103
    %v122 = vmul.f32 %v108, %v108
    %v123 = vsel %vm111, %v121, 0.0
    %v124 = vsel %vm111, %v122, 0.0
    %v125 = vadd.f32 %v123, %v124
    %v126 = vrot.slane %v125, 4
    %v127 = vadd.f32 %v125, %v126
    %v128 = vrot.slane %v127, 2
    %v129 = vadd.f32 %v127, %v128
    %v130 = vrot.slane %v129, 1
    %v131 = vadd.f32 %v129, %v130
    %v132 = vld [vmem:[%s3] sm:$0x1]
    %v133 = vld [vmem:[%s3 + $0x1] sm:$0x1]
    %v134 = vmul.f32 %v120, 0.125
    %v135 = vmul.f32 %v131, 0.125
    %v136 = vmul.f32 %v134, %v134
    %v137 = vsub.f32 %v135, %v136
    %v138 = vmax.f32 %v137, 0.0
    %v139 = vadd.f32 %v138, 1e-05
    %v140 = vrsqrt.pop %v139
    %v141 = vmul.f32 %v132, %v140
    %v142 = vmul.f32 %v134, %v141
    %v143 = vsub.f32 %v133, %v142
    %v144 = vlaneseq
    %v145 = vshrl.u32 %v144, 7
    %v146 = vsub.s32 0, %v145
    %v147 = vrot.slane %v141, %v146
    %v148 = vmul.f32 %v103, %v147
    %v149 = vmul.f32 %v108, %v147
    %v150 = vlaneseq
    %v151 = vshrl.u32 %v150, 7
    %v152 = vsub.s32 0, %v151
    %v153 = vrot.slane %v143, %v152
    %v154 = vadd.f32 %v148, %v153
    %v155 = vadd.f32 %v149, %v153
    %v156 = vmax.f32 %v154, 0.0
    %v157 = vmax.f32 %v155, 0.0
    %v158 = vld [vmem:[%s2] sm:$0xff]
    %v159 = vld [vmem:[%s2 + $0x8] sm:$0xff]
    %v160 = vld [vmem:[%s2 + $0x10] sm:$0xff]
    %v161 = vld [vmem:[%s2 + $0x18] sm:$0xff]
    %v162 = vld [vmem:[%s3 + $0x2] sm:$0x1]
    %v163 = vlaneseq
    %v164 = vshrl.u32 %v163, 7
    %v165 = vsub.s32 0, %v164
    %v166 = vrot.slane %v162, %v165
    %v168 = vsel %vm111, %v156, 0
    %v171 = vsel %vm111, %v157, 0
    %173 = vmatprep.subr.mxu0 0.0
    %174 = vmatpush1.msra.mxu0 0.0
    %175 = vmatprep.subr.mxu0 0.0
    %176 = vmatpush1.msra.mxu0 0.0
    %177 = vmatprep.subr.mxu0 0.0
    %178 = vmatpush1.msra.mxu0 0.0
    %179 = vmatprep.subr.mxu0 0.0
    %180 = vmatpush1.msra.mxu0 0.0
    %181 = vmatprep.subr.mxu0 0.0
    %182 = vmatpush1.msra.mxu0 0.0
    %183 = vmatprep.subr.mxu0 0.0
    %184 = vmatpush1.msra.mxu0 0.0
    %185 = vmatprep.subr.mxu0 0.0
    %186 = vmatpush1.msra.mxu0 0.0
    %187 = vmatprep.subr.mxu0 0.0
    %188 = vmatpush1.msra.mxu0 0.0
    %189 = vmatprep.subr.mxu0 0.0
    %190 = vmatpush1.msra.mxu0 0.0
    %191 = vmatprep.subr.mxu0 0.0
    %192 = vmatpush1.msra.mxu0 0.0
    %193 = vmatprep.subr.mxu0 0.0
    %194 = vmatpush1.msra.mxu0 0.0
    %195 = vmatprep.subr.mxu0 0.0
    %196 = vmatpush1.msra.mxu0 0.0
    %197 = vmatprep.subr.mxu0 0.0
    %198 = vmatpush1.msra.mxu0 %v161
    %199 = vmatprep.subr.mxu0 0.0
    %200 = vmatpush1.msra.mxu0 %v160
    %201 = vmatprep.subr.mxu0 0.0
    %202 = vmatpush1.msra.mxu0 %v159
    %203 = vmatprep.subr.mxu0 0.0
    %204 = vmatpush1.msra.mxu0 %v158
    %205 = vmatprep.subr.mxu0 0.0
    %206 = vmatpush2.msra.mxu0 0.0
    %207 = vmatprep.subr.mxu0 0.0
    %208 = vmatpush2.msra.mxu0 0.0
    %209 = vmatprep.subr.mxu0 0.0
    %210 = vmatpush2.msra.mxu0 0.0
    %211 = vmatprep.subr.mxu0 0.0
    %212 = vmatpush2.msra.mxu0 0.0
    %213 = vmatprep.subr.mxu0 0.0
    %214 = vmatpush2.msra.mxu0 0.0
    %215 = vmatprep.subr.mxu0 0.0
    %216 = vmatpush2.msra.mxu0 0.0
    %217 = vmatprep.subr.mxu0 0.0
    %218 = vmatpush2.msra.mxu0 0.0
    %219 = vmatprep.subr.mxu0 0.0
    %220 = vmatpush2.msra.mxu0 0.0
    %221 = vmatprep.subr.mxu0 0.0
    %222 = vmatpush2.msra.mxu0 0.0
    %223 = vmatprep.subr.mxu0 0.0
    %224 = vmatpush2.msra.mxu0 0.0
    %225 = vmatprep.subr.mxu0 0.0
    %226 = vmatpush2.msra.mxu0 0.0
    %227 = vmatprep.subr.mxu0 0.0
    %228 = vmatpush2.msra.mxu0 0.0
    %229 = vmatprep.subr.mxu0 0.0
    %230 = vmatpush2.msra.mxu0 0.0
    %231 = vmatprep.subr.mxu0 0.0
    %232 = vmatpush2.msra.mxu0 0.0
    %233 = vmatprep.subr.mxu0 0.0
    %234 = vmatpush2.msra.mxu0 0.0
    %235 = vmatprep.subr.mxu0 0.0
    %236 = vmatpush2.msra.mxu0 0.0
    %237 = vmatprep.mubr.f32.mxu0 0.0
    %238 = vmatmul.mubr.f32.gmra.mxu0 %v168
    %v239 = vpop.f32.mrf.mxu0
    %v240 = vadd.f32 %v166, %v239
    %v241 = vpop.f32.mrf.mxu0
    %242 = vmatprep.mubr.f32.mxu0 0.0
    %243 = vmatmul.mubr.f32.gmra.mxu0 %v171
    %v244 = vpop.f32.mrf.mxu0
    %v245 = vadd.f32 %v166, %v244
    %v246 = vpop.f32.mrf.mxu0
    %247 = vdwg.mxu0
    %vm248 = vcmask 146432
    %249 = vst.msk [vmem:[#allocation2] sm:$0xff] %vm248, %v240
    %250 = vst.msk [vmem:[#allocation2 + $0x8] sm:$0xff] %vm248, %v245
    // Predicated region
    $region18: #{tpu_custom_call.1} parent=1 // pred_check
      _
    $region19: #{tpu_custom_call.1} parent=1 // pred_check_branch
      %252 = sbr.rel (0) target = $region21
    $region20: #{tpu_custom_call.1} parent=1 // pred_region
      %s254 = ssub.s32 256, 256
      %255 = vsyncadd [#allocation3], %s254
      %s256 = sshll.u32 [#allocation2], 4
      %s257 = int_to_ptr.vmem [resolvable:$true] %s256
      %262 = dma.vmem_to_hbm [thread:$0]  %s257, 256, %s4, [#allocation3], 128, 128, 8
    $region21: #{tpu_custom_call.1} parent=1 // pred_fallthru
      _
    // Predicated region
    $region22: #{tpu_custom_call.1} parent=1 // pred_check
      _
    $region23: #{tpu_custom_call.1} parent=1 // pred_check_branch
      %264 = sbr.rel (0) target = $region25
    $region24: #{tpu_custom_call.1} parent=1 // pred_region
      %265 = dma.done [#allocation3], 256
    $region25: #{tpu_custom_call.1} parent=1 // pred_fallthru
      _
    %266 = vsyncpa [#allocation3], 1

</llo_original>
